<compile_context>
chip_gen: v5e
topology: v5e:2x2
jax: 0.10.0
libtpu: 0.0.40
codegen_flags: <defaults>
</compile_context>

<pallas_src>
from functools import partial

import jax
import jax.numpy as jnp
from jax.experimental import pallas as pl
from jax.experimental.pallas import tpu as pltpu

OUT_PAD = 128  # lane-dense packed head width: [probs(0..A-1) | value(A) | zero pad]


def actor_critic_kernel(state_ref, w1_ref, b1_ref, w2_ref, b2_ref,
                        wh_ref, bh_ref, out_ref, *, action_dim):
    x = state_ref[...]  # f32 [tb, state_dim]

    # shared layer 1: Linear + ReLU (f32 matmul; kernel is HBM-bound, MXU idle)
    h = jnp.dot(x, w1_ref[...], preferred_element_type=jnp.float32) + b1_ref[...]
    h = jnp.maximum(h, 0.0)

    # shared layer 2: Linear + ReLU
    h = jnp.dot(h, w2_ref[...], preferred_element_type=jnp.float32) + b2_ref[...]
    h = jnp.maximum(h, 0.0)

    # fused actor+critic head: single [hidden, 128] matmul, single bias add
    head = jnp.dot(h, wh_ref[...], preferred_element_type=jnp.float32) + bh_ref[...]

    col = jax.lax.broadcasted_iota(jnp.int32, head.shape, 1)
    is_actor = col < action_dim
    is_value = col == action_dim

    # softmax over the actor lanes only (exp(-inf) == 0 on padded lanes).
    # NOTE: ragged last grid block may contain garbage rows; they are computed
    # here but their stores are masked out by Pallas, so nothing escapes.
    logits = jnp.where(is_actor, head, -jnp.inf)
    m = jnp.max(logits, axis=-1, keepdims=True)
    e = jnp.exp(logits - m)
    inv = 1.0 / jnp.sum(e, axis=-1, keepdims=True)   # exact: probs sum to 1
    probs = e * inv

    # pack: probs on actor lanes (already 0 elsewhere) + value on lane A
    packed = probs + jnp.where(is_value, head, 0.0)
    out_ref[...] = packed.astype(out_ref.dtype)


def _round_up(x, m):
    return (x + m - 1) // m * m


def actor_critic_forward(state, params, action_dim, *, tile_b=1024,
                         out_dtype=jnp.bfloat16):
    """state: [B, state_dim] f32. Returns (action_probs [B, A], value [B, 1]) f32."""
    B, state_dim = state.shape
    hidden_dim = params["w1"].shape[1]
    assert action_dim + 1 <= OUT_PAD, "fused head supports action_dim <= 127"

    # Batch tile selection:
    #  * B small -> one full-array block (block == array dims, no (8,128) issue).
    #  * otherwise: largest multiple-of-16 tile <= tile_b, but small enough to
    #    give >= 2 grid steps (both v7x TensorCores get work). Ragged last block
    #    is handled by Pallas masked writes -- no wrapper-side jnp.pad.
    if B <= 32:
        tb = B
    else:
        tb = min(tile_b, _round_up(pl.cdiv(B, 2), 16))
        tb = min(tb, _round_up(B, 16))
    grid = (pl.cdiv(B, tb),)

    const = lambda i: (0, 0)  # weights resident in VMEM across all grid steps
    out = pl.pallas_call(
        partial(actor_critic_kernel, action_dim=action_dim),
        out_shape=jax.ShapeDtypeStruct((B, OUT_PAD), out_dtype),
        grid=grid,
        in_specs=[
            pl.BlockSpec((tb, state_dim), lambda i: (i, 0)),   # state tile
            pl.BlockSpec((state_dim, hidden_dim), const),      # w1
            pl.BlockSpec((1, hidden_dim), const),              # b1
            pl.BlockSpec((hidden_dim, hidden_dim), const),     # w2
            pl.BlockSpec((1, hidden_dim), const),              # b2
            pl.BlockSpec((hidden_dim, OUT_PAD), const),        # fused head W
            pl.BlockSpec((1, OUT_PAD), const),                 # fused head b
        ],
        out_specs=pl.BlockSpec((tb, OUT_PAD), lambda i: (i, 0)),
        compiler_params=pltpu.CompilerParams(
            dimension_semantics=("parallel",),
            vmem_limit_bytes=32 * 1024 * 1024),
    )(
        state,
        params["w1"], params["b1"],
        params["w2"], params["b2"],
        params["wh"], params["bh"],
    )

    action_probs = out[:, :action_dim].astype(jnp.float32)
    value = out[:, action_dim:action_dim + 1].astype(jnp.float32)
    return action_probs, value


def init_params(key, state_dim, action_dim, hidden_dim):
    """nn.Linear-style uniform(-1/sqrt(fan_in), +1/sqrt(fan_in)) init.
    Returns (kernel_params, ref_params). Kernel weights are [in, out] f32 with
    the actor/critic heads fused + zero-padded into one [hidden, 128] matrix."""
    assert action_dim + 1 <= OUT_PAD, "fused head supports action_dim <= 127"
    ks = jax.random.split(key, 8)

    def linear(kw, kb, fan_in, fan_out):
        bound = 1.0 / jnp.sqrt(fan_in)
        w = jax.random.uniform(kw, (fan_in, fan_out), jnp.float32, -bound, bound)
        b = jax.random.uniform(kb, (1, fan_out), jnp.float32, -bound, bound)
        return w, b

    w1, b1 = linear(ks[0], ks[1], state_dim, hidden_dim)
    w2, b2 = linear(ks[2], ks[3], hidden_dim, hidden_dim)
    wa, ba = linear(ks[4], ks[5], hidden_dim, action_dim)
    wc, bc = linear(ks[6], ks[7], hidden_dim, 1)

    # fuse actor + critic into one lane-padded head
    wh = jnp.zeros((hidden_dim, OUT_PAD), jnp.float32)
    wh = wh.at[:, :action_dim].set(wa).at[:, action_dim].set(wc[:, 0])
    bh = jnp.zeros((1, OUT_PAD), jnp.float32)
    bh = bh.at[:, :action_dim].set(ba).at[:, action_dim].set(bc[:, 0])

    kernel_params = {"w1": w1, "b1": b1, "w2": w2, "b2": b2, "wh": wh, "bh": bh}
    ref_params = {"w1": w1, "b1": b1, "w2": w2, "b2": b2,
                  "wa": wa, "ba": ba, "wc": wc, "bc": bc}
    return kernel_params, ref_params


def _ref_forward(x, p):
    h = jnp.maximum(x @ p["w1"] + p["b1"], 0.0)
    h = jnp.maximum(h @ p["w2"] + p["b2"], 0.0)
    probs = jax.nn.softmax(h @ p["wa"] + p["ba"], axis=-1)
    val = h @ p["wc"] + p["bc"]
    return probs, val


if __name__ == "__main__":
    key = jax.random.PRNGKey(0)
    k_params, k_state, k_state2 = jax.random.split(key, 3)

    batch = 8
    state_dim = 16
    action_dim = 8
    hidden_dim = 32

    kparams, rparams = init_params(k_params, state_dim, action_dim, hidden_dim)

    # small-batch path (single full-array block)
    state = jax.random.normal(k_state, (batch, state_dim), jnp.float32)
    action_probs, value = actor_critic_forward(state, kparams, action_dim)
    jax.block_until_ready((action_probs, value))

    rp, rv = _ref_forward(state, rparams)
    assert action_probs.shape == (batch, action_dim)
    assert value.shape == (batch, 1)
    # bf16 output storage -> ~1e-3 relative rounding vs f32 reference
    assert jnp.allclose(action_probs, rp, atol=2e-2, rtol=2e-2)
    assert jnp.allclose(value, rv, atol=2e-2, rtol=2e-2)
    assert jnp.allclose(jnp.sum(action_probs, axis=-1), 1.0, atol=1e-2)

    # multi-step grid with a ragged last block (exercises cdiv grid / masked writes)
    big_b = 100
    state2 = jax.random.normal(k_state2, (big_b, state_dim), jnp.float32)
    ap2, v2 = actor_critic_forward(state2, kparams, action_dim)
    jax.block_until_ready((ap2, v2))
    rp2, rv2 = _ref_forward(state2, rparams)
    assert ap2.shape == (big_b, action_dim) and v2.shape == (big_b, 1)
    assert jnp.allclose(ap2, rp2, atol=2e-2, rtol=2e-2)
    assert jnp.allclose(v2, rv2, atol=2e-2, rtol=2e-2)

    print("KERNEL_OK")
</pallas_src>

<mosaic_0001>
module attributes {stable_mosaic.version = 11 : i64} {
  func.func @actor_critic_kernel(%arg0: i32, %arg1: memref<8x16xf32, #tpu.memory_space<vmem>>, %arg2: memref<16x32xf32, #tpu.memory_space<vmem>>, %arg3: memref<1x32xf32, #tpu.memory_space<vmem>>, %arg4: memref<32x32xf32, #tpu.memory_space<vmem>>, %arg5: memref<1x32xf32, #tpu.memory_space<vmem>>, %arg6: memref<32x128xf32, #tpu.memory_space<vmem>>, %arg7: memref<1x128xf32, #tpu.memory_space<vmem>>, %arg8: memref<8x128xbf16, #tpu.memory_space<vmem>>) attributes {dimension_semantics = [#tpu.dimension_semantics<parallel>], iteration_bounds = array<i64: 1>, scalar_prefetch = 0 : i64, scratch_operands = 0 : i64, tpu.core_type = #tpu.core_type<tc>, window_params = [{transform_indices = @transform_0, window_bounds = array<i64: 8, 16>}, {pipeline_mode = #tpu.pipeline_mode<synchronous>, transform_indices = @transform_1, window_bounds = array<i64: 16, 32>}, {pipeline_mode = #tpu.pipeline_mode<synchronous>, transform_indices = @transform_2, window_bounds = array<i64: 1, 32>}, {pipeline_mode = #tpu.pipeline_mode<synchronous>, transform_indices = @transform_3, window_bounds = array<i64: 32, 32>}, {pipeline_mode = #tpu.pipeline_mode<synchronous>, transform_indices = @transform_4, window_bounds = array<i64: 1, 32>}, {pipeline_mode = #tpu.pipeline_mode<synchronous>, transform_indices = @transform_5, window_bounds = array<i64: 32, 128>}, {pipeline_mode = #tpu.pipeline_mode<synchronous>, transform_indices = @transform_6, window_bounds = array<i64: 1, 128>}, {transform_indices = @transform_7, window_bounds = array<i64: 8, 128>}]} {
    %c0 = arith.constant 0 : index
    %c0_0 = arith.constant 0 : index
    %0 = vector.load %arg1[%c0, %c0_0] : memref<8x16xf32, #tpu.memory_space<vmem>>, vector<8x16xf32>
    %c0_1 = arith.constant 0 : index
    %c0_2 = arith.constant 0 : index
    %1 = vector.load %arg2[%c0_1, %c0_2] : memref<16x32xf32, #tpu.memory_space<vmem>>, vector<16x32xf32>
    %cst = arith.constant dense<0.000000e+00> : vector<8x32xf32>
    %2 = tpu.matmul %0, %1, %cst {dimension_numbers = #tpu.dot_dimension_numbers<[1], [0], [0], [1], [0, 0, 1, 1], [], []>} : vector<8x16xf32>, vector<16x32xf32>, vector<8x32xf32> -> vector<8x32xf32>
    %c0_3 = arith.constant 0 : index
    %c0_4 = arith.constant 0 : index
    %3 = vector.load %arg3[%c0_3, %c0_4] : memref<1x32xf32, #tpu.memory_space<vmem>>, vector<1x32xf32>
    %4 = vector.broadcast %3 : vector<1x32xf32> to vector<8x32xf32>
    %5 = arith.addf %2, %4 : vector<8x32xf32>
    %cst_5 = arith.constant 0.000000e+00 : f32
    %6 = vector.broadcast %cst_5 : f32 to vector<8x32xf32>
    %7 = arith.maximumf %5, %6 : vector<8x32xf32>
    %c0_6 = arith.constant 0 : index
    %c0_7 = arith.constant 0 : index
    %8 = vector.load %arg4[%c0_6, %c0_7] : memref<32x32xf32, #tpu.memory_space<vmem>>, vector<32x32xf32>
    %cst_8 = arith.constant dense<0.000000e+00> : vector<8x32xf32>
    %9 = tpu.matmul %7, %8, %cst_8 {dimension_numbers = #tpu.dot_dimension_numbers<[1], [0], [0], [1], [0, 0, 1, 1], [], []>} : vector<8x32xf32>, vector<32x32xf32>, vector<8x32xf32> -> vector<8x32xf32>
    %c0_9 = arith.constant 0 : index
    %c0_10 = arith.constant 0 : index
    %10 = vector.load %arg5[%c0_9, %c0_10] : memref<1x32xf32, #tpu.memory_space<vmem>>, vector<1x32xf32>
    %11 = vector.broadcast %10 : vector<1x32xf32> to vector<8x32xf32>
    %12 = arith.addf %9, %11 : vector<8x32xf32>
    %cst_11 = arith.constant 0.000000e+00 : f32
    %13 = vector.broadcast %cst_11 : f32 to vector<8x32xf32>
    %14 = arith.maximumf %12, %13 : vector<8x32xf32>
    %c0_12 = arith.constant 0 : index
    %c0_13 = arith.constant 0 : index
    %15 = vector.load %arg6[%c0_12, %c0_13] : memref<32x128xf32, #tpu.memory_space<vmem>>, vector<32x128xf32>
    %cst_14 = arith.constant dense<0.000000e+00> : vector<8x128xf32>
    %16 = tpu.matmul %14, %15, %cst_14 {dimension_numbers = #tpu.dot_dimension_numbers<[1], [0], [0], [1], [0, 0, 1, 1], [], []>} : vector<8x32xf32>, vector<32x128xf32>, vector<8x128xf32> -> vector<8x128xf32>
    %c0_15 = arith.constant 0 : index
    %c0_16 = arith.constant 0 : index
    %17 = vector.load %arg7[%c0_15, %c0_16] : memref<1x128xf32, #tpu.memory_space<vmem>>, vector<1x128xf32>
    %18 = vector.broadcast %17 : vector<1x128xf32> to vector<8x128xf32>
    %19 = arith.addf %16, %18 : vector<8x128xf32>
    %20 = tpu.iota {dimensions = array<i32: 1>} : vector<8x128xi32>
    %c8_i32 = arith.constant 8 : i32
    %21 = vector.broadcast %c8_i32 : i32 to vector<8x128xi32>
    %22 = arith.cmpi slt, %20, %21 : vector<8x128xi32>
    %c8_i32_17 = arith.constant 8 : i32
    %23 = vector.broadcast %c8_i32_17 : i32 to vector<8x128xi32>
    %24 = arith.cmpi eq, %20, %23 : vector<8x128xi32>
    %cst_18 = arith.constant 0xFF800000 : f32
    %25 = vector.broadcast %cst_18 : f32 to vector<8x128xf32>
    %26 = arith.select %22, %19, %25 : vector<8x128xi1>, vector<8x128xf32>
    %cst_19 = arith.constant dense<0xFF800000> : vector<8xf32>
    %27 = vector.multi_reduction <maximumf>, %26, %cst_19 [1] : vector<8x128xf32> to vector<8xf32>
    %28 = vector.shape_cast %27 : vector<8xf32> to vector<8x1xf32>
    %29 = vector.broadcast %28 : vector<8x1xf32> to vector<8x128xf32>
    %30 = arith.subf %26, %29 : vector<8x128xf32>
    %31 = math.exp %30 : vector<8x128xf32>
    %cst_20 = arith.constant dense<0.000000e+00> : vector<8xf32>
    %32 = vector.multi_reduction <add>, %31, %cst_20 [1] : vector<8x128xf32> to vector<8xf32>
    %33 = vector.shape_cast %32 : vector<8xf32> to vector<8x1xf32>
    %cst_21 = arith.constant 1.000000e+00 : f32
    %34 = vector.broadcast %cst_21 : f32 to vector<8x1xf32>
    %35 = arith.divf %34, %33 : vector<8x1xf32>
    %36 = vector.broadcast %35 : vector<8x1xf32> to vector<8x128xf32>
    %37 = arith.mulf %31, %36 : vector<8x128xf32>
    %cst_22 = arith.constant 0.000000e+00 : f32
    %38 = vector.broadcast %cst_22 : f32 to vector<8x128xf32>
    %39 = arith.select %24, %19, %38 : vector<8x128xi1>, vector<8x128xf32>
    %40 = arith.addf %37, %39 : vector<8x128xf32>
    %41 = arith.truncf %40 : vector<8x128xf32> to vector<8x128xbf16>
    %c0_23 = arith.constant 0 : index
    %c0_24 = arith.constant 0 : index
    %42 = vector.load %arg8[%c0_23, %c0_24] : memref<8x128xbf16, #tpu.memory_space<vmem>>, vector<8x128xbf16>
    tpu.vector_store %arg8[%c0_23, %c0_24], %41 {strides = array<i32>} : memref<8x128xbf16, #tpu.memory_space<vmem>>, vector<8x128xbf16>,
    return
  }
  func.func @transform_0(%arg0: i32) -> (i32, i32) {
    %c0_i32 = arith.constant 0 : i32
    %c0_i32_0 = arith.constant 0 : i32
    return %arg0, %c0_i32 : i32, i32
  }
  func.func @transform_1(%arg0: i32) -> (i32, i32) {
    %c0_i32 = arith.constant 0 : i32
    %c0_i32_0 = arith.constant 0 : i32
    %c0_i32_1 = arith.constant 0 : i32
    return %c0_i32, %c0_i32_0 : i32, i32
  }
  func.func @transform_2(%arg0: i32) -> (i32, i32) {
    %c0_i32 = arith.constant 0 : i32
    %c0_i32_0 = arith.constant 0 : i32
    %c0_i32_1 = arith.constant 0 : i32
    return %c0_i32, %c0_i32_0 : i32, i32
  }
  func.func @transform_3(%arg0: i32) -> (i32, i32) {
    %c0_i32 = arith.constant 0 : i32
    %c0_i32_0 = arith.constant 0 : i32
    %c0_i32_1 = arith.constant 0 : i32
    return %c0_i32, %c0_i32_0 : i32, i32
  }
  func.func @transform_4(%arg0: i32) -> (i32, i32) {
    %c0_i32 = arith.constant 0 : i32
    %c0_i32_0 = arith.constant 0 : i32
    %c0_i32_1 = arith.constant 0 : i32
    return %c0_i32, %c0_i32_0 : i32, i32
  }
  func.func @transform_5(%arg0: i32) -> (i32, i32) {
    %c0_i32 = arith.constant 0 : i32
    %c0_i32_0 = arith.constant 0 : i32
    %c0_i32_1 = arith.constant 0 : i32
    return %c0_i32, %c0_i32_0 : i32, i32
  }
  func.func @transform_6(%arg0: i32) -> (i32, i32) {
    %c0_i32 = arith.constant 0 : i32
    %c0_i32_0 = arith.constant 0 : i32
    %c0_i32_1 = arith.constant 0 : i32
    return %c0_i32, %c0_i32_0 : i32, i32
  }
  func.func @transform_7(%arg0: i32) -> (i32, i32) {
    %c0_i32 = arith.constant 0 : i32
    %c0_i32_0 = arith.constant 0 : i32
    return %arg0, %c0_i32 : i32, i32
  }
}

</mosaic_0001>

<llo_original>
// kernel: tpu_custom_call.1
$region0: #{tpu_custom_call.1}
  #allocation0 [shape = 'u32[]', space=smem, size = 0x4, offset = 0x4, fixed_abs, tag = 'smem constant byte address 0x4 - core index']
  #allocation1 [shape = 'u32[72,128]{1,0:T(1,128)}', space=vmem, size = 0x9000, scoped, tag = 'internal scratch']
  %s0 = inlined_call_operand.hbm [shape: f32[8,16], index: 0, kind: input, shape index: {}]
  %s1 = inlined_call_operand.hbm [shape: f32[16,32], index: 1, kind: input, shape index: {}]
  %s2 = inlined_call_operand.vmem [shape: f32[1,32], index: 2, kind: input, shape index: {}]
  %s3 = inlined_call_operand.hbm [shape: f32[32,32], index: 3, kind: input, shape index: {}]
  %s4 = inlined_call_operand.vmem [shape: f32[1,32], index: 4, kind: input, shape index: {}]
  %s5 = inlined_call_operand.hbm [shape: f32[32,128], index: 5, kind: input, shape index: {}]
  %s6 = inlined_call_operand.vmem [shape: f32[1,128], index: 6, kind: input, shape index: {}]
  %s7 = inlined_call_operand.hbm [shape: bf16[8,128], index: 7, kind: output, shape index: {}]
  %s8 = sld [smem:[#allocation0]]
  $region54: #{tpu_custom_call.1} parent=0
    _
  %s10 = ssub.s32 1, %s8
  %s11 = scalar_select 0, %s10, %s8
  $region1: #{tpu_custom_call.1} parent=0
    #allocation2 [shape = 'u8[4096]{0}', space=vmem, size = 0x1000, scoped, tag = 'input window, operand 0, single buffered']
    #allocation3 [shape = 's32[1]{0}', space=sflag, size = 0x4, scoped, tag = 'scoped memory for tpu_custom_call.1']
    #allocation4 [shape = 's32[1]{0}', space=sflag, size = 0x4, scoped, tag = 'scoped memory for tpu_custom_call.1']
    #allocation5 [shape = 'u8[8192]{0}', space=vmem, size = 0x2000, scoped, tag = 'input window, operand 1, single buffered']
    #allocation6 [shape = 's32[1]{0}', space=sflag, size = 0x4, scoped, tag = 'scoped memory for tpu_custom_call.1']
    #allocation7 [shape = 'u8[16384]{0}', space=vmem, size = 0x4000, scoped, tag = 'input window, operand 3, single buffered']
    #allocation8 [shape = 'u8[16384]{0}', space=vmem, size = 0x4000, scoped, tag = 'input window, operand 5, single buffered']
    #allocation9 [shape = 's32[1]{0}', space=sflag, size = 0x4, scoped, tag = 'scoped memory for tpu_custom_call.1']
    #allocation10 [shape = 'u8[2048]{0}', space=vmem, size = 0x800, scoped, tag = 'output window, operand 0, single buffered']
    %12 = vsyncpa [#allocation3], 0
    %13 = vsyncpa [#allocation6], 0
    %14 = vsyncpa [#allocation9], 0
    %15 = vsyncpa [#allocation4], 0
    // Predicated region
    $region2: #{tpu_custom_call.1} parent=1 // pred_check
      _
    $region3: #{tpu_custom_call.1} parent=1 // pred_check_branch
      %17 = sbr.rel (0) target = $region5
    $region4: #{tpu_custom_call.1} parent=1 // pred_region
      %19 = vsyncadd [#allocation3], 0
      %s21 = sshll.u32 %s0, 4
      %s22 = int_to_ptr.hbm [resolvable:$true] %s21
      %s23 = sshll.u32 [#allocation2], 4
      %s24 = int_to_ptr.vmem [resolvable:$true] %s23
      %26 = dma.hbm_to_vmem [thread:$0]  %s22, 128, %s24, [#allocation3]
    $region5: #{tpu_custom_call.1} parent=1 // pred_fallthru
      _
    // Predicated region
    $region6: #{tpu_custom_call.1} parent=1 // pred_check
      _
    $region7: #{tpu_custom_call.1} parent=1 // pred_check_branch
      %28 = sbr.rel (0) target = $region9
    $region8: #{tpu_custom_call.1} parent=1 // pred_region
      %30 = vsyncadd [#allocation6], 0
      %s31 = sshll.u32 %s1, 4
      %s32 = int_to_ptr.hbm [resolvable:$true] %s31
      %s33 = sshll.u32 [#allocation5], 4
      %s34 = int_to_ptr.vmem [resolvable:$true] %s33
      %39 = dma.hbm_to_vmem [thread:$0]  %s32, 256, %s34, [#allocation6], 128, 128, 8
    $region9: #{tpu_custom_call.1} parent=1 // pred_fallthru
      _
    // Predicated region
    $region10: #{tpu_custom_call.1} parent=1 // pred_check
      _
    $region11: #{tpu_custom_call.1} parent=1 // pred_check_branch
      %41 = sbr.rel (0) target = $region13
    $region12: #{tpu_custom_call.1} parent=1 // pred_region
      _
    $region13: #{tpu_custom_call.1} parent=1 // pred_fallthru
      _
    // Predicated region
    $region14: #{tpu_custom_call.1} parent=1 // pred_check
      _
    $region15: #{tpu_custom_call.1} parent=1 // pred_check_branch
      %43 = sbr.rel (0) target = $region17
    $region16: #{tpu_custom_call.1} parent=1 // pred_region
      %45 = vsyncadd [#allocation6], 0
      %s46 = sshll.u32 %s3, 4
      %s47 = int_to_ptr.hbm [resolvable:$true] %s46
      %s48 = sshll.u32 [#allocation7], 4
      %s49 = int_to_ptr.vmem [resolvable:$true] %s48
      %54 = dma.hbm_to_vmem [thread:$0]  %s47, 512, %s49, [#allocation6], 128, 128, 8
    $region17: #{tpu_custom_call.1} parent=1 // pred_fallthru
      _
    // Predicated region
    $region18: #{tpu_custom_call.1} parent=1 // pred_check
      _
    $region19: #{tpu_custom_call.1} parent=1 // pred_check_branch
      %56 = sbr.rel (0) target = $region21
    $region20: #{tpu_custom_call.1} parent=1 // pred_region
      _
    $region21: #{tpu_custom_call.1} parent=1 // pred_fallthru
      _
    // Predicated region
    $region22: #{tpu_custom_call.1} parent=1 // pred_check
      _
    $region23: #{tpu_custom_call.1} parent=1 // pred_check_branch
      %58 = sbr.rel (0) target = $region25
    $region24: #{tpu_custom_call.1} parent=1 // pred_region
      %60 = vsyncadd [#allocation9], 0
      %s61 = sshll.u32 %s5, 4
      %s62 = int_to_ptr.hbm [resolvable:$true] %s61
      %s63 = sshll.u32 [#allocation8], 4
      %s64 = int_to_ptr.vmem [resolvable:$true] %s63
      %69 = dma.hbm_to_vmem [thread:$0]  %s62, 512, %s64, [#allocation9], 128, 128, 8
    $region25: #{tpu_custom_call.1} parent=1 // pred_fallthru
      _
    // Predicated region
    $region26: #{tpu_custom_call.1} parent=1 // pred_check
      _
    $region27: #{tpu_custom_call.1} parent=1 // pred_check_branch
      %71 = sbr.rel (0) target = $region29
    $region28: #{tpu_custom_call.1} parent=1 // pred_region
      _
    $region29: #{tpu_custom_call.1} parent=1 // pred_fallthru
      _
    // Predicated region
    $region30: #{tpu_custom_call.1} parent=1 // pred_check
      _
    $region31: #{tpu_custom_call.1} parent=1 // pred_check_branch
      %73 = sbr.rel (0) target = $region33
    $region32: #{tpu_custom_call.1} parent=1 // pred_region
      %75 = dma.done [#allocation3], 128
    $region33: #{tpu_custom_call.1} parent=1 // pred_fallthru
      _
    // Predicated region
    $region34: #{tpu_custom_call.1} parent=1 // pred_check
      _
    $region35: #{tpu_custom_call.1} parent=1 // pred_check_branch
      %77 = sbr.rel (0) target = $region37
    $region36: #{tpu_custom_call.1} parent=1 // pred_region
      %79 = dma.done [#allocation6], 256
    $region37: #{tpu_custom_call.1} parent=1 // pred_fallthru
      _
    // Predicated region
    $region38: #{tpu_custom_call.1} parent=1 // pred_check
      _
    $region39: #{tpu_custom_call.1} parent=1 // pred_check_branch
      %81 = sbr.rel (0) target = $region41
    $region40: #{tpu_custom_call.1} parent=1 // pred_region
      %83 = dma.done [#allocation6], 512
    $region41: #{tpu_custom_call.1} parent=1 // pred_fallthru
      _
    // Predicated region
    $region42: #{tpu_custom_call.1} parent=1 // pred_check
      _
    $region43: #{tpu_custom_call.1} parent=1 // pred_check_branch
      %85 = sbr.rel (0) target = $region45
    $region44: #{tpu_custom_call.1} parent=1 // pred_region
      %87 = dma.done [#allocation9], 512
    $region45: #{tpu_custom_call.1} parent=1 // pred_fallthru
      _
    %v88 = vld [vmem:[#allocation2] sm:$0xff]
    %v89 = vld [vmem:[#allocation5] sm:$0xff]
    %v90 = vld [vmem:[#allocation5 + $0x8] sm:$0xff]
    %v91 = vld [vmem:[%s2] sm:$0x1]
    %v93 = vperm.slane %v91, 0
    %vm95 = vcmask 130048
    %v97 = vsel %vm95, %v88, 0
    %99 = vmatpush.msra.mxu0 0.0
    %100 = vmatpush.msra.mxu0 0.0
    %101 = vmatpush.msra.mxu0 0.0
    %102 = vmatpush.msra.mxu0 0.0
    %103 = vmatpush.msra.mxu0 0.0
    %104 = vmatpush.msra.mxu0 0.0
    %105 = vmatpush.msra.mxu0 0.0
    %106 = vmatpush.msra.mxu0 0.0
    %107 = vmatpush.msra.mxu0 0.0
    %108 = vmatpush.msra.mxu0 0.0
    %109 = vmatpush.msra.mxu0 0.0
    %110 = vmatpush.msra.mxu0 0.0
    %111 = vmatpush.msra.mxu0 0.0
    %112 = vmatpush.msra.mxu0 0.0
    %113 = vmatpush.msra.mxu0 %v90
    %114 = vmatpush.msra.mxu0 %v89
    %115 = vmatmul.f32.gmra.mxu0 %v97
    %v116 = vpop.f32.mrf.mxu0
    %v117 = vadd.f32 %v93, %v116
    %118 = vdwg.mxu0
    %v119 = vmax.f32 %v117, 0.0
    %v120 = vld [vmem:[#allocation7] sm:$0xff]
    %v121 = vld [vmem:[#allocation7 + $0x8] sm:$0xff]
    %v122 = vld [vmem:[#allocation7 + $0x10] sm:$0xff]
    %v123 = vld [vmem:[#allocation7 + $0x18] sm:$0xff]
    %v124 = vld [vmem:[%s4] sm:$0x1]
    %v126 = vperm.slane %v124, 0
    %vm128 = vcmask 261120
    %v130 = vsel %vm128, %v119, 0
    %132 = vmatpush.msra.mxu0 0.0
    %133 = vmatpush.msra.mxu0 0.0
    %134 = vmatpush.msra.mxu0 0.0
    %135 = vmatpush.msra.mxu0 0.0
    %136 = vmatpush.msra.mxu0 0.0
    %137 = vmatpush.msra.mxu0 0.0
    %138 = vmatpush.msra.mxu0 0.0
    %139 = vmatpush.msra.mxu0 0.0
    %140 = vmatpush.msra.mxu0 0.0
    %141 = vmatpush.msra.mxu0 0.0
    %142 = vmatpush.msra.mxu0 0.0
    %143 = vmatpush.msra.mxu0 0.0
    %144 = vmatpush.msra.mxu0 %v123
    %145 = vmatpush.msra.mxu0 %v122
    %146 = vmatpush.msra.mxu0 %v121
    %147 = vmatpush.msra.mxu0 %v120
    %148 = vmatmul.f32.gmra.mxu0 %v130
    %v149 = vpop.f32.mrf.mxu0
    %v150 = vadd.f32 %v126, %v149
    %151 = vdwg.mxu0
    %v152 = vmax.f32 %v150, 0.0
    %v153 = vld [vmem:[#allocation8] sm:$0xff]
    %v154 = vld [vmem:[#allocation8 + $0x8] sm:$0xff]
    %v155 = vld [vmem:[#allocation8 + $0x10] sm:$0xff]
    %v156 = vld [vmem:[#allocation8 + $0x18] sm:$0xff]
    %v157 = vld [vmem:[%s6] sm:$0x1]
    %v159 = vperm.slane %v157, 0
    %v162 = vsel %vm128, %v152, 0
    %164 = vmatpush.msra.mxu0 0.0
    %165 = vmatpush.msra.mxu0 0.0
    %166 = vmatpush.msra.mxu0 0.0
    %167 = vmatpush.msra.mxu0 0.0
    %168 = vmatpush.msra.mxu0 0.0
    %169 = vmatpush.msra.mxu0 0.0
    %170 = vmatpush.msra.mxu0 0.0
    %171 = vmatpush.msra.mxu0 0.0
    %172 = vmatpush.msra.mxu0 0.0
    %173 = vmatpush.msra.mxu0 0.0
    %174 = vmatpush.msra.mxu0 0.0
    %175 = vmatpush.msra.mxu0 0.0
    %176 = vmatpush.msra.mxu0 %v156
    %177 = vmatpush.msra.mxu0 %v155
    %178 = vmatpush.msra.mxu0 %v154
    %179 = vmatpush.msra.mxu0 %v153
    %180 = vmatmul.f32.gmra.mxu0 %v162
    %v181 = vpop.f32.mrf.mxu0
    %v182 = vadd.f32 %v159, %v181
    %183 = vdwg.mxu0
    %v184 = vlaneseq
    %v185 = vand.u32 %v184, 127
    %vm186 = vcmp.lt.s32.totalorder %v185, 8
    %vm187 = vcmp.eq.s32.totalorder %v185, 8
    %v188 = vsel %vm186, %v182, -inf
    %189 = vmax.xlane.f32.xlu0 %v188
    %v190 = vpop.xlane.xlu0 %189
    %v191 = vsub.f32 %v188, %v190
    %v192 = vmul.f32 %v191, 1.442695
    %v193 = vpow.pop %v192
    %194 = vadd.xlane.f32.xlu0 %v193
    %v195 = vpop.xlane.xlu0 %194
    %v196 = vrcp.pop %v195
    %v197 = vmul.f32 %v195, %v196
    %v198 = vsub.f32 1.0, %v197
    %v199 = vmul.f32 %v196, %v198
    %v200 = vadd.f32 %v196, %v199
    %vm201 = vweird.f32 %v195
    %vm202 = vweird.f32 %v196
    %vm203 = vmor %vm201, %vm202
    %v204 = vsel %vm203, %v196, %v200
    %v205 = vand.u32 2147483647, %v195
    %vm206 = vcmp.eq.f32.partialorder %v205, 8.507059e+37
    %v207 = vand.u32 %v195, 2147483648
    %v208 = vor.u32 1.1754944e-38, %v207
    %v209 = vsel %vm206, %v208, %v204
    %v210 = vmul.f32 1.0, %v209
    %v211 = vmul.f32 %v193, %v210
    %v212 = vsel %vm187, %v182, 0.0
    %v213 = vadd.f32 %v211, %v212
    %v214 = vpack.c.bf16 %v213, %v213
    %215 = vst [vmem:[#allocation10] sm:$0xf] %v214
    // Predicated region
    $region46: #{tpu_custom_call.1} parent=1 // pred_check
      _
    $region47: #{tpu_custom_call.1} parent=1 // pred_check_branch
      %217 = sbr.rel (0) target = $region49
    $region48: #{tpu_custom_call.1} parent=1 // pred_region
      %219 = vsyncadd [#allocation4], 0
      %s221 = sshll.u32 [#allocation10], 4
      %s222 = int_to_ptr.vmem [resolvable:$true] %s221
      %s223 = sshll.u32 %s7, 4
      %s224 = int_to_ptr.hbm [resolvable:$true] %s223
      %226 = dma.vmem_to_hbm [thread:$0]  %s222, 64, %s224, [#allocation4]
    $region49: #{tpu_custom_call.1} parent=1 // pred_fallthru
      _
    // Predicated region
    $region50: #{tpu_custom_call.1} parent=1 // pred_check
      _
    $region51: #{tpu_custom_call.1} parent=1 // pred_check_branch
      %228 = sbr.rel (0) target = $region53
    $region52: #{tpu_custom_call.1} parent=1 // pred_region
      %230 = dma.done [#allocation4], 64
    $region53: #{tpu_custom_call.1} parent=1 // pred_fallthru
      _
    %231 = vsyncpa [#allocation3], 1
    %232 = vsyncpa [#allocation6], 1
    %233 = vsyncpa [#allocation9], 1
    %234 = vsyncpa [#allocation4], 1

</llo_original>
